<compile_context>
chip_gen: v7x
topology: tpu7x:2x2x1
jax: 0.10.0
libtpu: 0.0.40
codegen_flags: <defaults>
</compile_context>

<pallas_src>
import math
import jax
import jax.numpy as jnp
from jax import lax
from jax.experimental import pallas as pl
from jax.experimental.pallas import tpu as pltpu

_INV_SQRT_2PI = 1.0 / math.sqrt(2.0 * math.pi)
_INV_SQRT_2 = 1.0 / math.sqrt(2.0)


def _cont_sparsemax_kernel(basis_ref, par_ref, out_ref):
    # basis_ref: [8, TN] rows:
    #   0: pm                        (basis centers)
    #   1: ps_s    = ps / sqrt(2*pi)
    #   2: psinv2  = 1 / (ps * sqrt(2))
    #   3: pmps_s  = pm * ps / sqrt(2*pi)
    #   4: m2s2    = pm^2 + ps^2
    #   5-7: padding
    # par_ref  : [TB, 8] cols:
    #   0: 0.5*t0   1: 0.5*t1   2: 0.5*A   3: left   4: right
    #   5: c_a = t0 + t1*left   6: c_b = t0 + t1*right   7: t1
    basis = basis_ref[...]                      # [8, TN]
    pm = basis[0:1, :]
    ps_s = basis[1:2, :]
    psinv2 = basis[2:3, :]
    pmps_s = basis[3:4, :]
    m2s2 = basis[4:5, :]

    par = par_ref[...]                          # [TB, 8]
    t0h = par[:, 0:1]
    t1h = par[:, 1:2]
    Ah = par[:, 2:3]
    left = par[:, 3:4]
    right = par[:, 4:5]
    c_a = par[:, 5:6]
    c_b = par[:, 6:7]
    t1 = par[:, 7:8]

    # Standardized endpoints already divided by sqrt(2): w = (x - pm)/(ps*sqrt2)
    w_b = (right - pm) * psinv2                 # [TB, TN]
    w_a = (left - pm) * psinv2

    # Gaussian pdf up to the 1/sqrt(2*pi) factor (folded into ps_s / pmps_s).
    e_b = jnp.exp(-(w_b * w_b))                 # EUP
    e_a = jnp.exp(-(w_a * w_a))

    # Phi(z_b) - Phi(z_a) up to the 0.5 factor (folded into t0h/t1h/Ah).
    diff = lax.erf(w_b) - lax.erf(w_a)

    # theta folded into the coefficients of (erf diff) and the two exps.
    d_coef = t0h * pm + t1h * m2s2 - Ah         # multiplies (erf_b - erf_a)
    tp = t1 * pmps_s                            # shared between cb / ca
    cb = ps_s * c_b + tp                        # multiplies exp(-w_b^2)
    ca = ps_s * c_a + tp                        # multiplies exp(-w_a^2)

    out_ref[...] = d_coef * diff - cb * e_b + ca * e_a


def _largest_divisor_tile(total, cap, quantum):
    """Largest multiple of `quantum` that divides `total` and is <= max(cap, quantum)."""
    t = max((min(cap, total) // quantum) * quantum, quantum)
    while total % t != 0:
        t -= quantum
    return t


def _choose_tiles(B, Npad, tile_b, tile_n):
    # lane tile: multiple of 128 dividing Npad
    tile_n = _largest_divisor_tile(Npad, tile_n, 128)
    # batch tile: multiple of 8 dividing B, or the whole batch
    if B % 8 == 0:
        tile_b = _largest_divisor_tile(B, tile_b, 8)
    else:
        tile_b = B
    # v7x has 2 TensorCores: make sure the parallel grid has >= 2 steps.
    if (B // tile_b) * (Npad // tile_n) < 2:
        if Npad // 128 >= 2:
            tile_n = _largest_divisor_tile(Npad, Npad // 2, 128)
        elif B % 8 == 0 and B // 8 >= 2:
            tile_b = _largest_divisor_tile(B, B // 2, 8)
    return tile_b, tile_n


def continuous_sparsemax(theta, psi_mu, psi_sigma, *, tile_b=256, tile_n=1024):
    """theta: [B,2] f32 (theta[:,1] < 0 required); psi_mu/psi_sigma: [N] f32 -> [B,N] f32."""
    theta = theta.astype(jnp.float32)
    psi_mu = psi_mu.astype(jnp.float32)
    psi_sigma = psi_sigma.astype(jnp.float32)

    B = theta.shape[0]
    N = psi_mu.shape[0]

    # Pad the basis axis to a multiple of 128 so lane tiles are dense/unmasked.
    Npad = ((N + 127) // 128) * 128
    if Npad != N:
        psi_mu = jnp.pad(psi_mu, (0, Npad - N))
        psi_sigma = jnp.pad(psi_sigma, (0, Npad - N), constant_values=1.0)

    tile_b, tile_n = _choose_tiles(B, Npad, tile_b, tile_n)

    # ---- hoisted per-row ([B]-sized) truncated-parabola parameter math ----
    # NOTE: module contract requires theta[:,1] < 0; otherwise sigma is NaN
    # (same behavior as the PyTorch reference).
    t0 = theta[:, 0]
    t1 = theta[:, 1]
    sigma = jnp.sqrt(-0.5 / t1)
    mu = t0 * sigma * sigma
    A = -0.5 * (3.0 / (2.0 * sigma)) ** (2.0 / 3.0)
    a = jnp.sqrt(-2.0 * A) * sigma
    A = A + (mu * mu) / (2.0 * sigma * sigma)
    left = mu - a
    right = mu + a
    c_a = t0 + t1 * left
    c_b = t0 + t1 * right
    params = jnp.stack(
        [0.5 * t0, 0.5 * t1, 0.5 * A, left, right, c_a, c_b, t1], axis=1
    )  # [B, 8]

    # ---- hoisted per-column ([N]-sized) basis precompute, packed into one slab ----
    pm = psi_mu
    ps = psi_sigma
    zeros = jnp.zeros_like(pm)
    basis = jnp.stack(
        [pm,
         ps * _INV_SQRT_2PI,
         (1.0 / ps) * _INV_SQRT_2,
         pm * ps * _INV_SQRT_2PI,
         pm * pm + ps * ps,
         zeros, zeros, zeros],
        axis=0,
    )  # [8, Npad]

    # Lane-major grid: basis-slab block index only changes with the outer axis,
    # so it is re-DMA'd at most Npad//tile_n times total.
    grid = (Npad // tile_n, B // tile_b)

    cost = pl.CostEstimate(
        flops=25 * B * Npad,
        transcendentals=4 * B * Npad,          # 2 exp + 2 erf per element
        bytes_accessed=4 * B * Npad + 4 * 8 * (B + Npad),
    )

    out = pl.pallas_call(
        _cont_sparsemax_kernel,
        out_shape=jax.ShapeDtypeStruct((B, Npad), jnp.float32),
        grid_spec=pltpu.PrefetchScalarGridSpec(
            num_scalar_prefetch=0,
            grid=grid,
            in_specs=[
                pl.BlockSpec((8, tile_n), lambda j, i: (0, j)),      # basis slab
                pl.BlockSpec((tile_b, 8), lambda j, i: (i, 0)),      # per-row params
            ],
            out_specs=pl.BlockSpec((tile_b, tile_n), lambda j, i: (i, j)),
        ),
        compiler_params=pltpu.CompilerParams(
            dimension_semantics=("parallel", "parallel")),
        cost_estimate=cost,
    )(basis, params)

    if Npad != N:
        out = out[:, :N]
    return out


def _reference(theta, psi_mu, psi_sigma):
    """Pure-JAX port of the PyTorch forward for verification."""
    t0, t1 = theta[:, 0:1], theta[:, 1:2]
    sigma = jnp.sqrt(-0.5 / t1)
    mu = t0 * sigma ** 2
    A = -0.5 * (3.0 / (2.0 * sigma)) ** (2.0 / 3.0)
    a = jnp.sqrt(-2.0 * A) * sigma
    A = A + mu ** 2 / (2.0 * sigma ** 2)
    left, right = mu - a, mu + a
    pm = psi_mu[None, :]
    ps = psi_sigma[None, :]
    phi = lambda t: _INV_SQRT_2PI * jnp.exp(-0.5 * t ** 2)
    Phi = lambda t: 0.5 * (1.0 + lax.erf(t * _INV_SQRT_2))
    zb, za = (right - pm) / ps, (left - pm) / ps
    dPhi = Phi(zb) - Phi(za)
    V0 = pm * dPhi - ps * (phi(zb) - phi(za))
    V1 = (pm ** 2 + ps ** 2) * dPhi - ps * (right + pm) * phi(zb) + ps * (left + pm) * phi(za)
    return t0 * V0 + t1 * V1 - A * dPhi


if __name__ == "__main__":
    key = jax.random.PRNGKey(0)
    B, N = 8, 1024   # tile chooser guarantees >=2 parallel grid steps (v7x 2-TC)

    # Deterministic, valid theta: theta = [mu/sigma^2, -1/(2 sigma^2)],
    # with sigma > 0 so that theta[:,1] < 0 as the module requires.
    k1, k2 = jax.random.split(key, 2)
    loc = jax.random.normal(k1, (B,), dtype=jnp.float32) * 0.3 + 0.5
    scale = jax.random.uniform(k2, (B,), dtype=jnp.float32, minval=0.05, maxval=0.3)
    theta = jnp.stack([loc / scale ** 2, -0.5 / scale ** 2], axis=1)  # [B, 2]

    # Gaussian basis: N evenly spaced centers on [0, 1], fixed width.
    psi_mu = jnp.linspace(0.0, 1.0, N, dtype=jnp.float32)
    psi_sigma = jnp.full((N,), 0.1, dtype=jnp.float32)

    out = continuous_sparsemax(theta, psi_mu, psi_sigma)
    out = jax.block_until_ready(out)

    ref = _reference(theta, psi_mu, psi_sigma)
    assert out.shape == (B, N)
    assert jnp.allclose(out, ref, atol=1e-4, rtol=1e-4)

    print("KERNEL_OK")
</pallas_src>

<mosaic_0001>
module attributes {stable_mosaic.version = 11 : i64} {
  func.func @_cont_sparsemax_kernel(%arg0: i32, %arg1: i32, %arg2: memref<8x512xf32, #tpu.memory_space<vmem>>, %arg3: memref<8x8xf32, #tpu.memory_space<vmem>>, %arg4: memref<8x512xf32, #tpu.memory_space<vmem>>) attributes {dimension_semantics = [#tpu.dimension_semantics<parallel>, #tpu.dimension_semantics<parallel>], iteration_bounds = array<i64: 2, 1>, scalar_prefetch = 0 : i64, scratch_operands = 0 : i64, tpu.core_type = #tpu.core_type<tc>, window_params = [{transform_indices = @transform_0, window_bounds = array<i64: 8, 512>}, {transform_indices = @transform_1, window_bounds = array<i64: 8, 8>}, {transform_indices = @transform_2, window_bounds = array<i64: 8, 512>}]} {
    %c0 = arith.constant 0 : index
    %c0_0 = arith.constant 0 : index
    %0 = vector.load %arg2[%c0, %c0_0] : memref<8x512xf32, #tpu.memory_space<vmem>>, vector<8x512xf32>
    %1 = vector.extract_strided_slice %0 {offsets = [0, 0], sizes = [1, 512], strides = [1, 1]} : vector<8x512xf32> to vector<1x512xf32>
    %2 = vector.extract_strided_slice %0 {offsets = [1, 0], sizes = [1, 512], strides = [1, 1]} : vector<8x512xf32> to vector<1x512xf32>
    %3 = vector.extract_strided_slice %0 {offsets = [2, 0], sizes = [1, 512], strides = [1, 1]} : vector<8x512xf32> to vector<1x512xf32>
    %4 = vector.extract_strided_slice %0 {offsets = [3, 0], sizes = [1, 512], strides = [1, 1]} : vector<8x512xf32> to vector<1x512xf32>
    %5 = vector.extract_strided_slice %0 {offsets = [4, 0], sizes = [1, 512], strides = [1, 1]} : vector<8x512xf32> to vector<1x512xf32>
    %c0_1 = arith.constant 0 : index
    %c0_2 = arith.constant 0 : index
    %6 = vector.load %arg3[%c0_1, %c0_2] : memref<8x8xf32, #tpu.memory_space<vmem>>, vector<8x8xf32>
    %7 = vector.extract_strided_slice %6 {offsets = [0, 0], sizes = [8, 1], strides = [1, 1]} : vector<8x8xf32> to vector<8x1xf32>
    %8 = vector.extract_strided_slice %6 {offsets = [0, 1], sizes = [8, 1], strides = [1, 1]} : vector<8x8xf32> to vector<8x1xf32>
    %9 = vector.extract_strided_slice %6 {offsets = [0, 2], sizes = [8, 1], strides = [1, 1]} : vector<8x8xf32> to vector<8x1xf32>
    %10 = vector.extract_strided_slice %6 {offsets = [0, 3], sizes = [8, 1], strides = [1, 1]} : vector<8x8xf32> to vector<8x1xf32>
    %11 = vector.extract_strided_slice %6 {offsets = [0, 4], sizes = [8, 1], strides = [1, 1]} : vector<8x8xf32> to vector<8x1xf32>
    %12 = vector.extract_strided_slice %6 {offsets = [0, 5], sizes = [8, 1], strides = [1, 1]} : vector<8x8xf32> to vector<8x1xf32>
    %13 = vector.extract_strided_slice %6 {offsets = [0, 6], sizes = [8, 1], strides = [1, 1]} : vector<8x8xf32> to vector<8x1xf32>
    %14 = vector.extract_strided_slice %6 {offsets = [0, 7], sizes = [8, 1], strides = [1, 1]} : vector<8x8xf32> to vector<8x1xf32>
    %15 = vector.broadcast %11 : vector<8x1xf32> to vector<8x512xf32>
    %16 = vector.broadcast %1 : vector<1x512xf32> to vector<8x512xf32>
    %17 = arith.subf %15, %16 : vector<8x512xf32>
    %18 = vector.broadcast %3 : vector<1x512xf32> to vector<8x512xf32>
    %19 = arith.mulf %17, %18 : vector<8x512xf32>
    %20 = vector.broadcast %10 : vector<8x1xf32> to vector<8x512xf32>
    %21 = vector.broadcast %1 : vector<1x512xf32> to vector<8x512xf32>
    %22 = arith.subf %20, %21 : vector<8x512xf32>
    %23 = vector.broadcast %3 : vector<1x512xf32> to vector<8x512xf32>
    %24 = arith.mulf %22, %23 : vector<8x512xf32>
    %25 = arith.mulf %19, %19 : vector<8x512xf32>
    %cst = arith.constant 0.000000e+00 : f32
    %26 = vector.broadcast %cst : f32 to vector<8x512xf32>
    %27 = arith.subf %26, %25 : vector<8x512xf32>
    %28 = math.exp %27 : vector<8x512xf32>
    %29 = arith.mulf %24, %24 : vector<8x512xf32>
    %cst_3 = arith.constant 0.000000e+00 : f32
    %30 = vector.broadcast %cst_3 : f32 to vector<8x512xf32>
    %31 = arith.subf %30, %29 : vector<8x512xf32>
    %32 = math.exp %31 : vector<8x512xf32>
    %33 = math.erf %19 : vector<8x512xf32>
    %34 = math.erf %24 : vector<8x512xf32>
    %35 = arith.subf %33, %34 : vector<8x512xf32>
    %36 = vector.broadcast %7 : vector<8x1xf32> to vector<8x512xf32>
    %37 = vector.broadcast %1 : vector<1x512xf32> to vector<8x512xf32>
    %38 = arith.mulf %36, %37 : vector<8x512xf32>
    %39 = vector.broadcast %8 : vector<8x1xf32> to vector<8x512xf32>
    %40 = vector.broadcast %5 : vector<1x512xf32> to vector<8x512xf32>
    %41 = arith.mulf %39, %40 : vector<8x512xf32>
    %42 = arith.addf %38, %41 : vector<8x512xf32>
    %43 = vector.broadcast %9 : vector<8x1xf32> to vector<8x512xf32>
    %44 = arith.subf %42, %43 : vector<8x512xf32>
    %45 = vector.broadcast %14 : vector<8x1xf32> to vector<8x512xf32>
    %46 = vector.broadcast %4 : vector<1x512xf32> to vector<8x512xf32>
    %47 = arith.mulf %45, %46 : vector<8x512xf32>
    %48 = vector.broadcast %2 : vector<1x512xf32> to vector<8x512xf32>
    %49 = vector.broadcast %13 : vector<8x1xf32> to vector<8x512xf32>
    %50 = arith.mulf %48, %49 : vector<8x512xf32>
    %51 = arith.addf %50, %47 : vector<8x512xf32>
    %52 = vector.broadcast %2 : vector<1x512xf32> to vector<8x512xf32>
    %53 = vector.broadcast %12 : vector<8x1xf32> to vector<8x512xf32>
    %54 = arith.mulf %52, %53 : vector<8x512xf32>
    %55 = arith.addf %54, %47 : vector<8x512xf32>
    %56 = arith.mulf %44, %35 : vector<8x512xf32>
    %57 = arith.mulf %51, %28 : vector<8x512xf32>
    %58 = arith.subf %56, %57 : vector<8x512xf32>
    %59 = arith.mulf %55, %32 : vector<8x512xf32>
    %60 = arith.addf %58, %59 : vector<8x512xf32>
    %c0_4 = arith.constant 0 : index
    %c0_5 = arith.constant 0 : index
    %61 = vector.load %arg4[%c0_4, %c0_5] : memref<8x512xf32, #tpu.memory_space<vmem>>, vector<8x512xf32>
    tpu.vector_store %arg4[%c0_4, %c0_5], %60 {strides = array<i32>} : memref<8x512xf32, #tpu.memory_space<vmem>>, vector<8x512xf32>,
    return
  }
  func.func @transform_0(%arg0: i32, %arg1: i32) -> (i32, i32) {
    %c0_i32 = arith.constant 0 : i32
    %c0_i32_0 = arith.constant 0 : i32
    return %c0_i32, %arg0 : i32, i32
  }
  func.func @transform_1(%arg0: i32, %arg1: i32) -> (i32, i32) {
    %c0_i32 = arith.constant 0 : i32
    %c0_i32_0 = arith.constant 0 : i32
    return %arg1, %c0_i32 : i32, i32
  }
  func.func @transform_2(%arg0: i32, %arg1: i32) -> (i32, i32) {
    %c0_i32 = arith.constant 0 : i32
    return %arg1, %arg0 : i32, i32
  }
}

</mosaic_0001>

<llo_original>
// kernel: tpu_custom_call.1
$region0: #{tpu_custom_call.1}
  #allocation0 [shape = 'u32[]', space=smem, size = 0x4, offset = 0x4, fixed_abs, tag = 'smem constant byte address 0x4 - core index']
  #allocation1 [shape = 'u32[144,128]{1,0:T(1,128)}', space=vmem, size = 0x12000, scoped, tag = 'internal scratch']
  %s0 = inlined_call_operand.hbm [shape: f32[8,1024], index: 0, kind: input, shape index: {}]
  %s1 = inlined_call_operand.hbm [shape: f32[8,8], index: 1, kind: input, shape index: {}]
  %s2 = inlined_call_operand.hbm [shape: f32[8,1024], index: 2, kind: output, shape index: {}]
  %s3 = sld [smem:[#allocation0]]
  $region49: #{tpu_custom_call.1} parent=0
    _
  %s5 = ssub.s32 1, %s3
  %s6 = scalar_select 0, %s5, %s3
  $region1: #{tpu_custom_call.1} parent=0
    #allocation2 [shape = 'u8[32768]{0}', space=vmem, size = 0x8000, scoped, tag = 'input window, operand 0']
    #allocation3 [shape = 's32[2]{0}', space=sflag, size = 0x8, scoped, tag = 'scoped memory for tpu_custom_call.1']
    #allocation4 [shape = 's32[2]{0}', space=sflag, size = 0x8, scoped, tag = 'scoped memory for tpu_custom_call.1']
    #allocation5 [shape = 'u8[4096]{0}', space=vmem, size = 0x1000, scoped, tag = 'input window, operand 1, single buffered']
    #allocation6 [shape = 's32[1]{0}', space=sflag, size = 0x4, scoped, tag = 'scoped memory for tpu_custom_call.1']
    #allocation7 [shape = 'u8[32768]{0}', space=vmem, size = 0x8000, scoped, tag = 'output window, operand 0']
    %7 = vsyncpa [#allocation3], 0
    %s8 = scalar_lea.sflag [#allocation3], 1
    %9 = vsyncpa %s8, 0
    %10 = vsyncpa [#allocation6], 0
    %11 = vsyncpa [#allocation4], 0
    %s12 = scalar_lea.sflag [#allocation4], 1
    %13 = vsyncpa %s12, 0
    loop: start=0, step=1, limit=4
    $region2: #{tpu_custom_call.1} parent=1 // loop_pre_header
      _
    $region3: #{tpu_custom_call.1} parent=1 // loop_header
      %s15 = sphi 0, %s19
      %p16 = scmp.ge.s32.totalorder %s15, 4
      %s22 = sphi 0, %s34
      %s23 = sphi 0, %s30
      %s24 = sphi 0, %s22
      %s25 = sphi 0, %s23
      %s26 = sphi 0, %s24
      %s27 = sphi 0, %s25
      %s37 = sphi 0, %s39
      %s40 = sphi 0, %s37
      %s41 = sphi 0, %s40
      %s57 = sphi 0, %s41
      %s63 = sphi 0, %s65
      %s66 = sphi 0, %s63
      %s67 = sphi 0, %s66
      %s83 = sphi 0, %s67
      %s91 = sphi 0, %s93
      %s94 = sphi 0, %s91
      %s95 = sphi 0, %s94
      %s111 = sphi 0, %s95
    $region4: #{tpu_custom_call.1} parent=1 // loop_header_branch
      %18 = sbr.rel (%p16) target = $region8
    $region5: #{tpu_custom_call.1} parent=1 // loop_body
      %s20 = ssub.s32 %s15, 1
      %s21 = ssub.s32 %s15, 2
      %s28 = sadd.s32 1, %s23
      %p29 = scmp.ge.s32.totalorder %s28, 1
      %s30 = scalar_select %p29, 0, %s28
      %s31 = sadd.s32 1, %s22
      %s32 = scalar_select %p29, %s31, %s22
      %p33 = scmp.ge.s32.totalorder %s32, 2
      %s34 = scalar_select %p33, 0, %s32
      %s35 = ssub.s32 %s22, %s34
      %p36 = scmp.eq.s32.totalorder %s35, 0
      %s38 = sadd.s32 %s37, 1
      %s39 = scalar_select %p36, %s37, %s38
      %p42 = pneg %p36
      %p43 = scmp.eq.s32.totalorder %s15, 1
      %p44 = por %p42, %p43
      %p45 = scmp.ne.s32.totalorder %s37, %s40
      %p46 = scmp.eq.s32.totalorder %s15, 0
      %p47 = por %p45, %p46
      %p48 = scmp.ne.s32.totalorder %s37, %s40
      %p49 = scmp.eq.s32.totalorder %s20, 1
      %p50 = por %p48, %p49
      %p51 = scmp.ne.s32.totalorder %s40, %s41
      %p52 = scmp.eq.s32.totalorder %s20, 0
      %p53 = por %p51, %p52
      %p54 = scmp.ne.s32.totalorder %s40, %s41
      %p55 = scmp.eq.s32.totalorder %s21, 1
      %p56 = por %p54, %p55
      %p58 = scmp.ne.s32.totalorder %s41, %s57
      %p59 = scmp.eq.s32.totalorder %s21, 0
      %p60 = por %p58, %p59
      %s61 = ssub.s32 %s23, %s30
      %p62 = scmp.eq.s32.totalorder %s61, 0
      %s64 = sadd.s32 %s63, 1
      %s65 = scalar_select %p62, %s63, %s64
      %p68 = pneg %p62
      %p69 = scmp.eq.s32.totalorder %s15, 1
      %p70 = por %p68, %p69
      %p71 = scmp.ne.s32.totalorder %s63, %s66
      %p72 = scmp.eq.s32.totalorder %s15, 0
      %p73 = por %p71, %p72
      %p74 = scmp.ne.s32.totalorder %s63, %s66
      %p75 = scmp.eq.s32.totalorder %s20, 1
      %p76 = por %p74, %p75
      %p77 = scmp.ne.s32.totalorder %s66, %s67
      %p78 = scmp.eq.s32.totalorder %s20, 0
      %p79 = por %p77, %p78
      %p80 = scmp.ne.s32.totalorder %s66, %s67
      %p81 = scmp.eq.s32.totalorder %s21, 1
      %p82 = por %p80, %p81
      %p84 = scmp.ne.s32.totalorder %s67, %s83
      %p85 = scmp.eq.s32.totalorder %s21, 0
      %p86 = por %p84, %p85
      %s87 = ssub.s32 %s23, %s30
      %s88 = ssub.s32 %s22, %s34
      %s89 = sor.u32 %s87, %s88
      %p90 = scmp.eq.s32.totalorder %s89, 0
      %s92 = sadd.s32 %s91, 1
      %s93 = scalar_select %p90, %s91, %s92
      %p96 = pneg %p90
      %p97 = scmp.eq.s32.totalorder %s15, 1
      %p98 = por %p96, %p97
      %p99 = scmp.ne.s32.totalorder %s91, %s94
      %p100 = scmp.eq.s32.totalorder %s15, 0
      %p101 = por %p99, %p100
      %p102 = scmp.ne.s32.totalorder %s91, %s94
      %p103 = scmp.eq.s32.totalorder %s20, 1
      %p104 = por %p102, %p103
      %p105 = scmp.ne.s32.totalorder %s94, %s95
      %p106 = scmp.eq.s32.totalorder %s20, 0
      %p107 = por %p105, %p106
      %p108 = scmp.ne.s32.totalorder %s94, %s95
      %p109 = scmp.eq.s32.totalorder %s21, 1
      %p110 = por %p108, %p109
      %p112 = scmp.ne.s32.totalorder %s95, %s111
      %p113 = scmp.eq.s32.totalorder %s21, 0
      %p114 = por %p112, %p113
      %p115 = scmp.le.s32.totalorder 1, %s15
      %p116 = scmp.lt.s32.totalorder %s15, 3
      %p117 = pnand %p115, %p116
      %p118 = pneg %p117
      // Predicated region
      $region9: #{tpu_custom_call.1} parent=5 // pred_check
        _
      $region10: #{tpu_custom_call.1} parent=5 // pred_check_branch
        %120 = sbr.rel (%p117) target = $region12
      $region11: #{tpu_custom_call.1} parent=5 // pred_region
        %s121 = ssub.s32 %s15, 1
        // Predicated region
        $region13: #{tpu_custom_call.1} parent=11 // pred_check
          %p122 = pneg %p79
        $region14: #{tpu_custom_call.1} parent=11 // pred_check_branch
          %124 = sbr.rel (%p122) target = $region16
        $region15: #{tpu_custom_call.1} parent=11 // pred_region
          %s126 = ssub.s32 128, 128
          %127 = vsyncadd [#allocation6], %s126
          %s128 = smul.addr %s25, 128
          %s129 = scalar_lea.hbm %s1, %s128
          %s131 = sshll.u32 [#allocation5], 4
          %s132 = int_to_ptr.vmem [resolvable:$true] %s131
          %134 = dma.hbm_to_vmem [thread:$0]  %s129, 128, %s132, [#allocation6]
        $region16: #{tpu_custom_call.1} parent=11 // pred_fallthru
          _
      $region12: #{tpu_custom_call.1} parent=5 // pred_fallthru
        _
      %p135 = scmp.lt.s32.totalorder %s15, 2
      // Predicated region
      $region17: #{tpu_custom_call.1} parent=5 // pred_check
        %p136 = pneg %p135
      $region18: #{tpu_custom_call.1} parent=5 // pred_check_branch
        %138 = sbr.rel (%p136) target = $region20
      $region19: #{tpu_custom_call.1} parent=5 // pred_region
        // Predicated region
        $region21: #{tpu_custom_call.1} parent=19 // pred_check
          %p139 = pneg %p47
        $region22: #{tpu_custom_call.1} parent=19 // pred_check_branch
          %141 = sbr.rel (%p139) target = $region24
        $region23: #{tpu_custom_call.1} parent=19 // pred_region
          %s142 = sand.u32 %s37, 1
          %s143 = scalar_lea.sflag [#allocation3], %s142
          %s144 = sand.u32 %s37, 1
          %s145 = smul.addr %s144, 32
          %s146 = scalar_lea.vmem [#allocation2], %s145
          %s147 = smul.u32 4, %s22
          %s149 = ssub.s32 512, 512
          %150 = vsyncadd %s143, %s149
          %s151 = smul.addr %s147, 128
          %s152 = scalar_lea.hbm %s0, %s151
          %s154 = sshll.u32 %s146, 4
          %s155 = int_to_ptr.vmem [resolvable:$true] %s154
          %157 = dma.hbm_to_vmem [thread:$0]  %s152, 512, %s155, %s143
        $region24: #{tpu_custom_call.1} parent=19 // pred_fallthru
          _
      $region20: #{tpu_custom_call.1} parent=5 // pred_fallthru
        _
      %p158 = scmp.le.s32.totalorder 1, %s15
      %p159 = scmp.lt.s32.totalorder %s15, 3
      %p160 = pnand %p158, %p159
      %p161 = pneg %p160
      // Predicated region
      $region25: #{tpu_custom_call.1} parent=5 // pred_check
        _
      $region26: #{tpu_custom_call.1} parent=5 // pred_check_branch
        %163 = sbr.rel (%p160) target = $region28
      $region27: #{tpu_custom_call.1} parent=5 // pred_region
        %s164 = ssub.s32 %s15, 1
        %s165 = sand.u32 %s40, 1
        %s166 = scalar_lea.sflag [#allocation3], %s165
        %s167 = sand.u32 %s40, 1
        %s168 = smul.addr %s167, 32
        %s169 = scalar_lea.vmem [#allocation2], %s168
        // Predicated region
        $region29: #{tpu_custom_call.1} parent=27 // pred_check
          %p170 = pneg %p53
        $region30: #{tpu_custom_call.1} parent=27 // pred_check_branch
          %172 = sbr.rel (%p170) target = $region32
        $region31: #{tpu_custom_call.1} parent=27 // pred_region
          %173 = dma.done %s166, 512
        $region32: #{tpu_custom_call.1} parent=27 // pred_fallthru
          _
        // Predicated region
        $region33: #{tpu_custom_call.1} parent=27 // pred_check
          %p174 = pneg %p79
        $region34: #{tpu_custom_call.1} parent=27 // pred_check_branch
          %176 = sbr.rel (%p174) target = $region36
        $region35: #{tpu_custom_call.1} parent=27 // pred_region
          %177 = dma.done [#allocation6], 128
        $region36: #{tpu_custom_call.1} parent=27 // pred_fallthru
          _
        %s178 = sand.u32 %s40, 1
        %s179 = scalar_lea.sflag [#allocation3], %s178
        %s180 = sand.u32 %s40, 1
        %s181 = smul.addr %s180, 32
        %s182 = scalar_lea.vmem [#allocation2], %s181
        %p183 = pneg %p53
        %p184 = pneg %p50
        %p185 = pneg %p79
        %p186 = pneg %p76
        %p187 = pneg %p107
        %p188 = pneg %p104
        %s189 = sand.u32 %s94, 1
        %s190 = scalar_lea.sflag [#allocation4], %s189
        %s191 = sand.u32 %s94, 1
        %s192 = smul.addr %s191, 32
        %s193 = scalar_lea.vmem [#allocation7], %s192
        %s194 = smul.u32 4, %s24
        %s195 = smul.u32 4, %s24
        %v196 = vld [vmem:[%s169] sm:$0xff]
        %v197 = vld [vmem:[%s169 + $0x8] sm:$0xff]
        %v198 = vld [vmem:[%s169 + $0x10] sm:$0xff]
        %v199 = vld [vmem:[%s169 + $0x18] sm:$0xff]
        %v200 = vld [vmem:[#allocation5] sm:$0xff]
        %202 = vset.pattern.permute.xlu0 4
        %203 = vperm.xlu0 %202, %v200
        %v204 = vpop.permute.xlu0 %203
        %v206 = vlaneseq
        %v207 = vshrl.u32 %v206, 7
        %v208 = vsub.s32 0, %v207
        %v209 = vrot.slane %v196, %v208
        %v210 = vlaneseq
        %v211 = vshrl.u32 %v210, 7
        %v212 = vsub.s32 0, %v211
        %v213 = vrot.slane %v197, %v212
        %v214 = vlaneseq
        %v215 = vshrl.u32 %v214, 7
        %v216 = vsub.s32 0, %v215
        %v217 = vrot.slane %v198, %v216
        %v218 = vlaneseq
        %v219 = vshrl.u32 %v218, 7
        %v220 = vsub.s32 0, %v219
        %v221 = vrot.slane %v199, %v220
        %v222 = vsub.f32 %v204, %v209
        %v223 = vsub.f32 %v204, %v213
        %v224 = vsub.f32 %v204, %v217
        %v225 = vsub.f32 %v204, %v221
        %v226 = vlaneseq
        %v227 = vshrl.u32 %v226, 7
        %v228 = vsub.s32 2, %v227
        %v229 = vrot.slane %v196, %v228
        %v230 = vlaneseq
        %v231 = vshrl.u32 %v230, 7
        %v232 = vsub.s32 2, %v231
        %v233 = vrot.slane %v197, %v232
        %v234 = vlaneseq
        %v235 = vshrl.u32 %v234, 7
        %v236 = vsub.s32 2, %v235
        %v237 = vrot.slane %v198, %v236
        %v238 = vlaneseq
        %v239 = vshrl.u32 %v238, 7
        %v240 = vsub.s32 2, %v239
        %v241 = vrot.slane %v199, %v240
        %v242 = vmul.f32 %v222, %v229
        %v243 = vmul.f32 %v223, %v233
        %v244 = vmul.f32 %v224, %v237
        %v245 = vmul.f32 %v225, %v241
        %246 = vset.pattern.permute.xlu0 3
        %247 = vperm.xlu0 %246, %v200
        %v248 = vpop.permute.xlu0 %247
        %v250 = vsub.f32 %v248, %v209
        %v251 = vsub.f32 %v248, %v213
        %v252 = vsub.f32 %v248, %v217
        %v253 = vsub.f32 %v248, %v221
        %v254 = vmul.f32 %v250, %v229
        %v255 = vmul.f32 %v251, %v233
        %v256 = vmul.f32 %v252, %v237
        %v257 = vmul.f32 %v253, %v241
        %v258 = vmul.f32 %v242, %v242
        %v259 = vmul.f32 %v243, %v243
        %v260 = vmul.f32 %v244, %v244
        %v261 = vmul.f32 %v245, %v245
        %v262 = vsub.f32 0.0, %v258
        %v263 = vsub.f32 0.0, %v259
        %v264 = vsub.f32 0.0, %v260
        %v265 = vsub.f32 0.0, %v261
        %v266 = vmul.f32 %v262, 1.442695
        %v267 = vpow.pop %v266
        %v268 = vmul.f32 %v263, 1.442695
        %v269 = vpow.pop %v268
        %v270 = vmul.f32 %v264, 1.442695
        %v271 = vpow.pop %v270
        %v272 = vmul.f32 %v265, 1.442695
        %v273 = vpow.pop %v272
        %v274 = vmul.f32 %v254, %v254
        %v275 = vmul.f32 %v255, %v255
        %v276 = vmul.f32 %v256, %v256
        %v277 = vmul.f32 %v257, %v257
        %v278 = vsub.f32 0.0, %v274
        %v279 = vsub.f32 0.0, %v275
        %v280 = vsub.f32 0.0, %v276
        %v281 = vsub.f32 0.0, %v277
        %v282 = vmul.f32 %v278, 1.442695
        %v283 = vpow.pop %v282
        %v284 = vmul.f32 %v279, 1.442695
        %v285 = vpow.pop %v284
        %v286 = vmul.f32 %v280, 1.442695
        %v287 = vpow.pop %v286
        %v288 = vmul.f32 %v281, 1.442695
        %v289 = vpow.pop %v288
        %v290 = verf.f32.pop %v242
        %v291 = verf.f32.pop %v243
        %v292 = verf.f32.pop %v244
        %v293 = verf.f32.pop %v245
        %v294 = verf.f32.pop %v254
        %v295 = verf.f32.pop %v255
        %v296 = verf.f32.pop %v256
        %v297 = verf.f32.pop %v257
        %v298 = vsub.f32 %v290, %v294
        %v299 = vsub.f32 %v291, %v295
        %v300 = vsub.f32 %v292, %v296
        %v301 = vsub.f32 %v293, %v297
        %302 = vset.pattern.permute.xlu0 0
        %303 = vperm.xlu0 %302, %v200
        %v304 = vpop.permute.xlu0 %303
        %v306 = vmul.f32 %v304, %v209
        %v307 = vmul.f32 %v304, %v213
        %v308 = vmul.f32 %v304, %v217
        %v309 = vmul.f32 %v304, %v221
        %310 = vset.pattern.permute.xlu0 1
        %311 = vperm.xlu0 %310, %v200
        %v312 = vpop.permute.xlu0 %311
        %v314 = vlaneseq
        %v315 = vshrl.u32 %v314, 7
        %v316 = vsub.s32 4, %v315
        %v317 = vrot.slane %v196, %v316
        %v318 = vlaneseq
        %v319 = vshrl.u32 %v318, 7
        %v320 = vsub.s32 4, %v319
        %v321 = vrot.slane %v197, %v320
        %v322 = vlaneseq
        %v323 = vshrl.u32 %v322, 7
        %v324 = vsub.s32 4, %v323
        %v325 = vrot.slane %v198, %v324
        %v326 = vlaneseq
        %v327 = vshrl.u32 %v326, 7
        %v328 = vsub.s32 4, %v327
        %v329 = vrot.slane %v199, %v328
        %v330 = vmul.f32 %v312, %v317
        %v331 = vmul.f32 %v312, %v321
        %v332 = vmul.f32 %v312, %v325
        %v333 = vmul.f32 %v312, %v329
        %v334 = vadd.f32 %v306, %v330
        %v335 = vadd.f32 %v307, %v331
        %v336 = vadd.f32 %v308, %v332
        %v337 = vadd.f32 %v309, %v333
        %338 = vset.pattern.permute.xlu0 2
        %339 = vperm.xlu0 %338, %v200
        %v340 = vpop.permute.xlu0 %339
        %v342 = vsub.f32 %v334, %v340
        %v343 = vsub.f32 %v335, %v340
        %v344 = vsub.f32 %v336, %v340
        %v345 = vsub.f32 %v337, %v340
        %346 = vset.pattern.permute.xlu0 7
        %347 = vperm.xlu0 %346, %v200
        %v348 = vpop.permute.xlu0 %347
        %v350 = vlaneseq
        %v351 = vshrl.u32 %v350, 7
        %v352 = vsub.s32 3, %v351
        %v353 = vrot.slane %v196, %v352
        %v354 = vlaneseq
        %v355 = vshrl.u32 %v354, 7
        %v356 = vsub.s32 3, %v355
        %v357 = vrot.slane %v197, %v356
        %v358 = vlaneseq
        %v359 = vshrl.u32 %v358, 7
        %v360 = vsub.s32 3, %v359
        %v361 = vrot.slane %v198, %v360
        %v362 = vlaneseq
        %v363 = vshrl.u32 %v362, 7
        %v364 = vsub.s32 3, %v363
        %v365 = vrot.slane %v199, %v364
        %v366 = vmul.f32 %v348, %v353
        %v367 = vmul.f32 %v348, %v357
        %v368 = vmul.f32 %v348, %v361
        %v369 = vmul.f32 %v348, %v365
        %v370 = vlaneseq
        %v371 = vshrl.u32 %v370, 7
        %v372 = vsub.s32 1, %v371
        %v373 = vrot.slane %v196, %v372
        %v374 = vlaneseq
        %v375 = vshrl.u32 %v374, 7
        %v376 = vsub.s32 1, %v375
        %v377 = vrot.slane %v197, %v376
        %v378 = vlaneseq
        %v379 = vshrl.u32 %v378, 7
        %v380 = vsub.s32 1, %v379
        %v381 = vrot.slane %v198, %v380
        %v382 = vlaneseq
        %v383 = vshrl.u32 %v382, 7
        %v384 = vsub.s32 1, %v383
        %v385 = vrot.slane %v199, %v384
        %386 = vset.pattern.permute.xlu0 6
        %387 = vperm.xlu0 %386, %v200
        %v388 = vpop.permute.xlu0 %387
        %v390 = vmul.f32 %v373, %v388
        %v391 = vmul.f32 %v377, %v388
        %v392 = vmul.f32 %v381, %v388
        %v393 = vmul.f32 %v385, %v388
        %v394 = vadd.f32 %v390, %v366
        %v395 = vadd.f32 %v391, %v367
        %v396 = vadd.f32 %v392, %v368
        %v397 = vadd.f32 %v393, %v369
        %398 = vset.pattern.permute.xlu0 5
        %399 = vperm.xlu0 %398, %v200
        %v400 = vpop.permute.xlu0 %399
        %v402 = vmul.f32 %v373, %v400
        %v403 = vmul.f32 %v377, %v400
        %v404 = vmul.f32 %v381, %v400
        %v405 = vmul.f32 %v385, %v400
        %v406 = vadd.f32 %v402, %v366
        %v407 = vadd.f32 %v403, %v367
        %v408 = vadd.f32 %v404, %v368
        %v409 = vadd.f32 %v405, %v369
        %v410 = vmul.f32 %v342, %v298
        %v411 = vmul.f32 %v343, %v299
        %v412 = vmul.f32 %v344, %v300
        %v413 = vmul.f32 %v345, %v301
        %v414 = vmul.f32 %v394, %v267
        %v415 = vmul.f32 %v395, %v269
        %v416 = vmul.f32 %v396, %v271
        %v417 = vmul.f32 %v397, %v273
        %v418 = vsub.f32 %v410, %v414
        %v419 = vsub.f32 %v411, %v415
        %v420 = vsub.f32 %v412, %v416
        %v421 = vsub.f32 %v413, %v417
        %v422 = vmul.f32 %v406, %v283
        %v423 = vmul.f32 %v407, %v285
        %v424 = vmul.f32 %v408, %v287
        %v425 = vmul.f32 %v409, %v289
        %v426 = vadd.f32 %v418, %v422
        %v427 = vadd.f32 %v419, %v423
        %v428 = vadd.f32 %v420, %v424
        %v429 = vadd.f32 %v421, %v425
        %430 = vst [vmem:[%s193] sm:$0xff] %v426
        %431 = vst [vmem:[%s193 + $0x8] sm:$0xff] %v427
        %432 = vst [vmem:[%s193 + $0x10] sm:$0xff] %v428
        %433 = vst [vmem:[%s193 + $0x18] sm:$0xff] %v429
        %s434 = sand.u32 %s94, 1
        %s435 = scalar_lea.sflag [#allocation4], %s434
        %s436 = sand.u32 %s94, 1
        %s437 = smul.addr %s436, 32
        %s438 = scalar_lea.vmem [#allocation7], %s437
        // Predicated region
        $region37: #{tpu_custom_call.1} parent=27 // pred_check
          %p439 = pneg %p104
        $region38: #{tpu_custom_call.1} parent=27 // pred_check_branch
          %441 = sbr.rel (%p439) target = $region40
        $region39: #{tpu_custom_call.1} parent=27 // pred_region
          %s442 = smul.u32 4, %s24
          %s444 = ssub.s32 512, 512
          %445 = vsyncadd %s435, %s444
          %s446 = smul.addr %s25, 8
          %s447 = sadd.s32 %s442, %s446
          %s448 = smul.addr %s447, 128
          %s449 = scalar_lea.hbm %s2, %s448
          %s451 = sshll.u32 %s438, 4
          %s452 = int_to_ptr.vmem [resolvable:$true] %s451
          %454 = dma.vmem_to_hbm [thread:$0]  %s452, 512, %s449, %s435
        $region40: #{tpu_custom_call.1} parent=27 // pred_fallthru
          _
      $region28: #{tpu_custom_call.1} parent=5 // pred_fallthru
        _
      %p455 = scmp.le.s32.totalorder 2, %s15
      // Predicated region
      $region41: #{tpu_custom_call.1} parent=5 // pred_check
        %p456 = pneg %p455
      $region42: #{tpu_custom_call.1} parent=5 // pred_check_branch
        %458 = sbr.rel (%p456) target = $region44
      $region43: #{tpu_custom_call.1} parent=5 // pred_region
        %s459 = ssub.s32 %s15, 2
        // Predicated region
        $region45: #{tpu_custom_call.1} parent=43 // pred_check
          %p460 = pneg %p110
        $region46: #{tpu_custom_call.1} parent=43 // pred_check_branch
          %462 = sbr.rel (%p460) target = $region48
        $region47: #{tpu_custom_call.1} parent=43 // pred_region
          %s463 = sand.u32 %s95, 1
          %s464 = scalar_lea.sflag [#allocation4], %s463
          %s465 = sand.u32 %s95, 1
          %s466 = smul.addr %s465, 32
          %s467 = scalar_lea.vmem [#allocation7], %s466
          %468 = dma.done %s464, 512
        $region48: #{tpu_custom_call.1} parent=43 // pred_fallthru
          _
      $region44: #{tpu_custom_call.1} parent=5 // pred_fallthru
        _
    $region6: #{tpu_custom_call.1} parent=1 // loop_footer
      %s19 = sadd.s32 1, %s15
    $region7: #{tpu_custom_call.1} parent=1 // loop_footer_branch
      %14 = sbr.rel target = $region3
    $region8: #{tpu_custom_call.1} parent=1 // loop_exit
      _
    %469 = vsyncpa [#allocation3], 1
    %s470 = scalar_lea.sflag [#allocation3], 1
    %471 = vsyncpa %s470, 1
    %472 = vsyncpa [#allocation6], 1
    %473 = vsyncpa [#allocation4], 1
    %s474 = scalar_lea.sflag [#allocation4], 1
    %475 = vsyncpa %s474, 1

</llo_original>
